<compile_context>
chip_gen: v7x
topology: tpu7x:2x2x1
jax: 0.10.0
libtpu: 0.0.40
codegen_flags: <defaults>
</compile_context>

<pallas_src>
import functools

import jax
import jax.numpy as jnp
from jax import lax
from jax.experimental import pallas as pl
from jax.experimental.pallas import tpu as pltpu

INPUT_DIM = 6
H1 = 64
H2 = 32
CHUNK = 256          # batch lanes per inner-loop slab (2 vregs wide)


def _round_up(n: int, m: int) -> int:
    return ((n + m - 1) // m) * m


def _cdiv(a: int, b: int) -> int:
    return (a + b - 1) // b


def _mlp_kernel(xt_ref, w1t_ref, b1_ref, w2t_ref, b2_ref, w3_ref, b3_ref, o_ref):
    # Weights/biases have constant index maps -> resident in VMEM across the
    # grid; load them once per grid step, outside the chunk loop.
    w1t = w1t_ref[...]          # (64, 6)   f32
    b1 = b1_ref[...]            # (64, 1)   f32
    w2t = w2t_ref[...]          # (32, 64)  f32
    b2 = b2_ref[...]            # (32, 1)   f32
    w3 = w3_ref[...]            # (32, 1)   f32
    b3 = b3_ref[0, 0]           # scalar f32 (SMEM)

    n_chunks = xt_ref.shape[0]  # static (chunks per grid step)

    def body(j, carry):
        # One 256-lane slab of the batch.  h1/h2 stay in vregs (~16 + 8 vregs);
        # no VMEM round-trips for intermediates.
        xc = xt_ref[j].astype(jnp.float32)                          # (6, CHUNK)
        h1 = jnp.dot(w1t, xc, preferred_element_type=jnp.float32)   # MXU
        h1 = jnp.maximum(h1 + b1, 0.0)                              # (64, CHUNK)
        # Dropout(0.2) is identity at inference.
        h2 = jnp.dot(w2t, h1, preferred_element_type=jnp.float32)   # MXU
        h2 = jnp.maximum(h2 + b2, 0.0)                              # (32, CHUNK)
        # Layer 3 (32 -> 1): VPU broadcast-multiply + sublane (XLU) reduce.
        z = jnp.sum(h2 * w3, axis=0, keepdims=True) + b3            # (1, CHUNK)
        o_ref[j] = 1.0 / (1.0 + jnp.exp(-z))                        # sigmoid
        return carry

    # Sweep knob: `unroll=` on this loop trades code size / register pressure
    # for LLO scheduling visibility.
    lax.fori_loop(0, n_chunks, body, 0)


@functools.partial(jax.jit, static_argnames=("block_b",))
def rugpull_detector_forward(x, w1, b1, w2, b2, w3, b3, *, block_b=32768):
    """x: (B, 6) f32.  Weights stored (in_dim, out_dim), biases (1, out_dim)."""
    assert block_b % CHUNK == 0 and block_b >= CHUNK
    B = x.shape[0]

    # Wrapper layout plumbing (one fused XLA pass over x): pad the batch only up
    # to a CHUNK multiple, fold into (n_chunks, 6, CHUNK) so the batch is on the
    # lane axis, cast to bf16 for HBM transport.  Ideally the upstream producer
    # emits x in this layout directly.
    b_pad = _round_up(max(B, 1), CHUNK)
    n_chunks = b_pad // CHUNK
    xt = jnp.pad(x, ((0, b_pad - B), (0, 0)))
    xt = xt.reshape(n_chunks, CHUNK, INPUT_DIM).transpose(0, 2, 1)
    xt = xt.astype(jnp.bfloat16)                                  # (nc, 6, CHUNK)

    w1t = w1.T.astype(jnp.float32)                                # (64, 6)
    w2t = w2.T.astype(jnp.float32)                                # (32, 64)
    b1c = b1.astype(jnp.float32).reshape(H1, 1)                   # (64, 1)
    b2c = b2.astype(jnp.float32).reshape(H2, 1)                   # (32, 1)
    w3c = w3.astype(jnp.float32).reshape(H2, 1)                   # (32, 1)
    b3s = b3.astype(jnp.float32).reshape(1, 1)                    # SMEM scalar

    # Tile selection: big tiles amortize per-step cost; intermediates no longer
    # scale with the tile (they live in vregs), so VMEM use is just the streamed
    # x / out blocks (~2-3 MiB double-buffered at the default) — fits every
    # generation's scoped-VMEM default, including v7x's 64 MiB/TC.
    cpt = min(block_b // CHUNK, n_chunks)          # chunks per grid step
    if n_chunks >= 2:
        # Keep >= 2 grid steps so both v7x TensorCores get work.
        cpt = min(cpt, _cdiv(n_chunks, 2))
    grid = (_cdiv(n_chunks, cpt),)

    out = pl.pallas_call(
        _mlp_kernel,
        out_shape=jax.ShapeDtypeStruct((n_chunks, 1, CHUNK), jnp.float32),
        grid=grid,
        in_specs=[
            # Streaming batch tiles of x (lane-dense, bf16).
            pl.BlockSpec((cpt, INPUT_DIM, CHUNK), lambda i: (i, 0, 0)),
            # Weights / biases: constant index maps -> resident across the grid.
            pl.BlockSpec((H1, INPUT_DIM), lambda i: (0, 0)),
            pl.BlockSpec((H1, 1), lambda i: (0, 0)),
            pl.BlockSpec((H2, H1), lambda i: (0, 0)),
            pl.BlockSpec((H2, 1), lambda i: (0, 0)),
            pl.BlockSpec((H2, 1), lambda i: (0, 0)),
            # Scalar bias of the last layer lives in SMEM.
            pl.BlockSpec(memory_space=pltpu.SMEM),
        ],
        # Lane-dense output: batch on the lane axis, full-width stores.
        out_specs=pl.BlockSpec((cpt, 1, CHUNK), lambda i: (i, 0, 0)),
        compiler_params=pltpu.CompilerParams(
            dimension_semantics=("parallel",),
            vmem_limit_bytes=32 * 1024 * 1024),
    )(xt, w1t, b1c, w2t, b2c, w3c, b3s)

    # (nc, 1, CHUNK) is contiguous -> flatten is free; drop the small pad.
    return out.reshape(-1)[:B].reshape(B, 1)


def init_params(key, input_dim=INPUT_DIM, hidden_dim=H1):
    """Deterministic init mimicking torch.nn.Linear (U(-1/sqrt(fan_in), ...))."""
    dims = [(input_dim, hidden_dim), (hidden_dim, hidden_dim // 2),
            (hidden_dim // 2, 1)]
    params = []
    for (fan_in, fan_out) in dims:
        key, kw, kb = jax.random.split(key, 3)
        bound = 1.0 / (fan_in ** 0.5)
        w = jax.random.uniform(kw, (fan_in, fan_out), jnp.float32, -bound, bound)
        b = jax.random.uniform(kb, (1, fan_out), jnp.float32, -bound, bound)
        params += [w, b]
    return params


def reference_forward(x, w1, b1, w2, b2, w3, b3):
    h1 = jnp.maximum(x @ w1 + b1, 0.0)
    h2 = jnp.maximum(h1 @ w2 + b2, 0.0)
    return jax.nn.sigmoid(h2 @ w3 + b3)


if __name__ == "__main__":
    key = jax.random.PRNGKey(0)
    key, kx, kx2 = jax.random.split(key, 3)
    w1, b1, w2, b2, w3, b3 = init_params(key)

    # Small smoke test: 8 samples of 6 on-chain risk features in [0, 1].
    batch = 8
    x = jax.random.uniform(kx, (batch, INPUT_DIM), jnp.float32)
    out = jax.block_until_ready(rugpull_detector_forward(x, w1, b1, w2, b2, w3, b3))
    ref = reference_forward(x, w1, b1, w2, b2, w3, b3)
    assert out.shape == (batch, 1)
    # bf16 transport of x bounds accuracy to ~1e-3; use a relaxed tolerance.
    assert jnp.allclose(out, ref, atol=1e-2), (out, ref)

    # Exercise a multi-step grid + partial-chunk padding (B not a CHUNK multiple).
    batch2 = 300
    x2 = jax.random.uniform(kx2, (batch2, INPUT_DIM), jnp.float32)
    out2 = jax.block_until_ready(
        rugpull_detector_forward(x2, w1, b1, w2, b2, w3, b3, block_b=512))
    ref2 = reference_forward(x2, w1, b1, w2, b2, w3, b3)
    assert out2.shape == (batch2, 1)
    assert jnp.allclose(out2, ref2, atol=1e-2)

    print("KERNEL_OK")
</pallas_src>

<mosaic_0001>
module attributes {stable_mosaic.version = 11 : i64} {
  func.func @_mlp_kernel(%arg0: i32, %arg1: memref<1x6x256xbf16, #tpu.memory_space<vmem>>, %arg2: memref<64x6xf32, #tpu.memory_space<vmem>>, %arg3: memref<64x1xf32, #tpu.memory_space<vmem>>, %arg4: memref<32x64xf32, #tpu.memory_space<vmem>>, %arg5: memref<32x1xf32, #tpu.memory_space<vmem>>, %arg6: memref<32x1xf32, #tpu.memory_space<vmem>>, %arg7: memref<1x1xf32, #tpu.memory_space<smem>>, %arg8: memref<1x1x256xf32, #tpu.memory_space<vmem>>) attributes {dimension_semantics = [#tpu.dimension_semantics<parallel>], iteration_bounds = array<i64: 1>, scalar_prefetch = 0 : i64, scratch_operands = 0 : i64, tpu.core_type = #tpu.core_type<tc>, window_params = [{transform_indices = @transform_0, window_bounds = array<i64: 1, 6, 256>}, {pipeline_mode = #tpu.pipeline_mode<synchronous>, transform_indices = @transform_1, window_bounds = array<i64: 64, 6>}, {pipeline_mode = #tpu.pipeline_mode<synchronous>, transform_indices = @transform_2, window_bounds = array<i64: 64, 1>}, {pipeline_mode = #tpu.pipeline_mode<synchronous>, transform_indices = @transform_3, window_bounds = array<i64: 32, 64>}, {pipeline_mode = #tpu.pipeline_mode<synchronous>, transform_indices = @transform_4, window_bounds = array<i64: 32, 1>}, {pipeline_mode = #tpu.pipeline_mode<synchronous>, transform_indices = @transform_5, window_bounds = array<i64: 32, 1>}, {transform_indices = @transform_6, window_bounds = array<i64: 1, 1>}, {transform_indices = @transform_7, window_bounds = array<i64: 1, 1, 256>}]} {
    %c0 = arith.constant 0 : index
    %c0_0 = arith.constant 0 : index
    %0 = vector.load %arg2[%c0, %c0_0] : memref<64x6xf32, #tpu.memory_space<vmem>>, vector<64x6xf32>
    %c0_1 = arith.constant 0 : index
    %c0_2 = arith.constant 0 : index
    %1 = vector.load %arg3[%c0_1, %c0_2] : memref<64x1xf32, #tpu.memory_space<vmem>>, vector<64x1xf32>
    %c0_3 = arith.constant 0 : index
    %c0_4 = arith.constant 0 : index
    %2 = vector.load %arg4[%c0_3, %c0_4] : memref<32x64xf32, #tpu.memory_space<vmem>>, vector<32x64xf32>
    %c0_5 = arith.constant 0 : index
    %c0_6 = arith.constant 0 : index
    %3 = vector.load %arg5[%c0_5, %c0_6] : memref<32x1xf32, #tpu.memory_space<vmem>>, vector<32x1xf32>
    %c0_7 = arith.constant 0 : index
    %c0_8 = arith.constant 0 : index
    %4 = vector.load %arg6[%c0_7, %c0_8] : memref<32x1xf32, #tpu.memory_space<vmem>>, vector<32x1xf32>
    %c0_9 = arith.constant 0 : index
    %c0_10 = arith.constant 0 : index
    %5 = memref.load %arg7[%c0_9, %c0_10] : memref<1x1xf32, #tpu.memory_space<smem>>
    %c0_i32 = arith.constant 0 : i32
    %6 = arith.index_cast %c0_i32 : i32 to index
    %c0_11 = arith.constant 0 : index
    %c0_12 = arith.constant 0 : index
    %7 = vector.load %arg1[%6, %c0_11, %c0_12] : memref<1x6x256xbf16, #tpu.memory_space<vmem>>, vector<1x6x256xbf16>
    %8 = vector.shape_cast %7 : vector<1x6x256xbf16> to vector<6x256xbf16>
    %9 = arith.extf %8 : vector<6x256xbf16> to vector<6x256xf32>
    %cst = arith.constant dense<0.000000e+00> : vector<64x256xf32>
    %10 = tpu.matmul %0, %9, %cst {dimension_numbers = #tpu.dot_dimension_numbers<[1], [0], [0], [1], [0, 0, 1, 1], [], []>} : vector<64x6xf32>, vector<6x256xf32>, vector<64x256xf32> -> vector<64x256xf32>
    %11 = vector.broadcast %1 : vector<64x1xf32> to vector<64x256xf32>
    %12 = arith.addf %10, %11 : vector<64x256xf32>
    %cst_13 = arith.constant 0.000000e+00 : f32
    %13 = vector.broadcast %cst_13 : f32 to vector<64x256xf32>
    %14 = arith.maximumf %12, %13 : vector<64x256xf32>
    %cst_14 = arith.constant dense<0.000000e+00> : vector<32x256xf32>
    %15 = tpu.matmul %2, %14, %cst_14 {dimension_numbers = #tpu.dot_dimension_numbers<[1], [0], [0], [1], [0, 0, 1, 1], [], []>} : vector<32x64xf32>, vector<64x256xf32>, vector<32x256xf32> -> vector<32x256xf32>
    %16 = vector.broadcast %3 : vector<32x1xf32> to vector<32x256xf32>
    %17 = arith.addf %15, %16 : vector<32x256xf32>
    %cst_15 = arith.constant 0.000000e+00 : f32
    %18 = vector.broadcast %cst_15 : f32 to vector<32x256xf32>
    %19 = arith.maximumf %17, %18 : vector<32x256xf32>
    %20 = vector.broadcast %4 : vector<32x1xf32> to vector<32x256xf32>
    %21 = arith.mulf %19, %20 : vector<32x256xf32>
    %cst_16 = arith.constant dense<0.000000e+00> : vector<256xf32>
    %22 = vector.multi_reduction <add>, %21, %cst_16 [0] : vector<32x256xf32> to vector<256xf32>
    %23 = vector.shape_cast %22 : vector<256xf32> to vector<1x256xf32>
    %24 = vector.broadcast %5 : f32 to vector<1x256xf32>
    %25 = arith.addf %23, %24 : vector<1x256xf32>
    %cst_17 = arith.constant 0.000000e+00 : f32
    %26 = vector.broadcast %cst_17 : f32 to vector<1x256xf32>
    %27 = arith.subf %26, %25 : vector<1x256xf32>
    %28 = math.exp %27 : vector<1x256xf32>
    %cst_18 = arith.constant 1.000000e+00 : f32
    %29 = vector.broadcast %cst_18 : f32 to vector<1x256xf32>
    %30 = arith.addf %29, %28 : vector<1x256xf32>
    %cst_19 = arith.constant 1.000000e+00 : f32
    %31 = vector.broadcast %cst_19 : f32 to vector<1x256xf32>
    %32 = arith.divf %31, %30 : vector<1x256xf32>
    %33 = arith.index_cast %c0_i32 : i32 to index
    %c0_20 = arith.constant 0 : index
    %c0_21 = arith.constant 0 : index
    %34 = vector.load %arg8[%33, %c0_20, %c0_21] : memref<1x1x256xf32, #tpu.memory_space<vmem>>, vector<1x1x256xf32>
    %35 = vector.shape_cast %34 : vector<1x1x256xf32> to vector<1x256xf32>
    %36 = vector.shape_cast %32 : vector<1x256xf32> to vector<1x1x256xf32>
    tpu.vector_store %arg8[%33, %c0_20, %c0_21], %36 {strides = array<i32>} : memref<1x1x256xf32, #tpu.memory_space<vmem>>, vector<1x1x256xf32>,
    %c1_i32 = arith.constant 1 : i32
    return
  }
  func.func @transform_0(%arg0: i32) -> (i32, i32, i32) {
    %c0_i32 = arith.constant 0 : i32
    %c0_i32_0 = arith.constant 0 : i32
    %c0_i32_1 = arith.constant 0 : i32
    return %arg0, %c0_i32, %c0_i32_0 : i32, i32, i32
  }
  func.func @transform_1(%arg0: i32) -> (i32, i32) {
    %c0_i32 = arith.constant 0 : i32
    %c0_i32_0 = arith.constant 0 : i32
    %c0_i32_1 = arith.constant 0 : i32
    return %c0_i32, %c0_i32_0 : i32, i32
  }
  func.func @transform_2(%arg0: i32) -> (i32, i32) {
    %c0_i32 = arith.constant 0 : i32
    %c0_i32_0 = arith.constant 0 : i32
    %c0_i32_1 = arith.constant 0 : i32
    return %c0_i32, %c0_i32_0 : i32, i32
  }
  func.func @transform_3(%arg0: i32) -> (i32, i32) {
    %c0_i32 = arith.constant 0 : i32
    %c0_i32_0 = arith.constant 0 : i32
    %c0_i32_1 = arith.constant 0 : i32
    return %c0_i32, %c0_i32_0 : i32, i32
  }
  func.func @transform_4(%arg0: i32) -> (i32, i32) {
    %c0_i32 = arith.constant 0 : i32
    %c0_i32_0 = arith.constant 0 : i32
    %c0_i32_1 = arith.constant 0 : i32
    return %c0_i32, %c0_i32_0 : i32, i32
  }
  func.func @transform_5(%arg0: i32) -> (i32, i32) {
    %c0_i32 = arith.constant 0 : i32
    %c0_i32_0 = arith.constant 0 : i32
    %c0_i32_1 = arith.constant 0 : i32
    return %c0_i32, %c0_i32_0 : i32, i32
  }
  func.func @transform_6(%arg0: i32) -> (i32, i32) {
    %c0_i32 = arith.constant 0 : i32
    %c0_i32_0 = arith.constant 0 : i32
    %c0_i32_1 = arith.constant 0 : i32
    return %c0_i32, %c0_i32_0 : i32, i32
  }
  func.func @transform_7(%arg0: i32) -> (i32, i32, i32) {
    %c0_i32 = arith.constant 0 : i32
    %c0_i32_0 = arith.constant 0 : i32
    %c0_i32_1 = arith.constant 0 : i32
    return %arg0, %c0_i32, %c0_i32_0 : i32, i32, i32
  }
}

</mosaic_0001>

<llo_original>
// kernel: rugpull_detector_forward.1
$region0: #{rugpull_detector_forward.1}
  #allocation0 [shape = 'u32[]', space=smem, size = 0x4, offset = 0x4, fixed_abs, tag = 'smem constant byte address 0x4 - core index']
  #allocation1 [shape = 'u32[144,128]{1,0:T(1,128)}', space=vmem, size = 0x12000, scoped, tag = 'internal scratch']
  #allocation2 [shape = 'f32[1,1]{1,0:T(1,128)S(6)}', space=smem, size = 0x200, scoped, tag = 'scoped memory for rugpull_detector_forward.1']
  %s0 = inlined_call_operand.vmem [shape: bf16[1,6,256], index: 0, kind: input, shape index: {}]
  %s1 = inlined_call_operand.vmem [shape: f32[64,6], index: 1, kind: input, shape index: {}]
  %s2 = inlined_call_operand.vmem [shape: f32[64,1], index: 2, kind: input, shape index: {}]
  %s3 = inlined_call_operand.vmem [shape: f32[32,64], index: 3, kind: input, shape index: {}]
  %s4 = inlined_call_operand.vmem [shape: f32[32,1], index: 4, kind: input, shape index: {}]
  %s5 = inlined_call_operand.vmem [shape: f32[32,1], index: 5, kind: input, shape index: {}]
  %s6 = inlined_call_operand.<no memory space> [shape: f32[1,1], index: 6, kind: input, shape index: {}]
  %s7 = inlined_call_operand.vmem [shape: f32[1,1,256], index: 7, kind: output, shape index: {}]
  %s8 = sld [smem:[#allocation0]]
  $region38: #{rugpull_detector_forward.1} parent=0
    _
  %s10 = ssub.s32 1, %s8
  %s11 = scalar_select 0, %s10, %s8
  %12 = sst [smem:[#allocation2]] %s6
  // Predicated region
  $region2: #{rugpull_detector_forward.1} parent=0 // pred_check
    _
  $region3: #{rugpull_detector_forward.1} parent=0 // pred_check_branch
    %14 = sbr.rel (0) target = $region5
  $region4: #{rugpull_detector_forward.1} parent=0 // pred_region
    _
  $region5: #{rugpull_detector_forward.1} parent=0 // pred_fallthru
    _
  // Predicated region
  $region6: #{rugpull_detector_forward.1} parent=0 // pred_check
    _
  $region7: #{rugpull_detector_forward.1} parent=0 // pred_check_branch
    %16 = sbr.rel (0) target = $region9
  $region8: #{rugpull_detector_forward.1} parent=0 // pred_region
    _
  $region9: #{rugpull_detector_forward.1} parent=0 // pred_fallthru
    _
  // Predicated region
  $region10: #{rugpull_detector_forward.1} parent=0 // pred_check
    _
  $region11: #{rugpull_detector_forward.1} parent=0 // pred_check_branch
    %18 = sbr.rel (0) target = $region13
  $region12: #{rugpull_detector_forward.1} parent=0 // pred_region
    _
  $region13: #{rugpull_detector_forward.1} parent=0 // pred_fallthru
    _
  // Predicated region
  $region14: #{rugpull_detector_forward.1} parent=0 // pred_check
    _
  $region15: #{rugpull_detector_forward.1} parent=0 // pred_check_branch
    %20 = sbr.rel (0) target = $region17
  $region16: #{rugpull_detector_forward.1} parent=0 // pred_region
    _
  $region17: #{rugpull_detector_forward.1} parent=0 // pred_fallthru
    _
  // Predicated region
  $region18: #{rugpull_detector_forward.1} parent=0 // pred_check
    _
  $region19: #{rugpull_detector_forward.1} parent=0 // pred_check_branch
    %22 = sbr.rel (0) target = $region21
  $region20: #{rugpull_detector_forward.1} parent=0 // pred_region
    _
  $region21: #{rugpull_detector_forward.1} parent=0 // pred_fallthru
    _
  // Predicated region
  $region22: #{rugpull_detector_forward.1} parent=0 // pred_check
    _
  $region23: #{rugpull_detector_forward.1} parent=0 // pred_check_branch
    %24 = sbr.rel (0) target = $region25
  $region24: #{rugpull_detector_forward.1} parent=0 // pred_region
    _
  $region25: #{rugpull_detector_forward.1} parent=0 // pred_fallthru
    _
  // Predicated region
  $region26: #{rugpull_detector_forward.1} parent=0 // pred_check
    _
  $region27: #{rugpull_detector_forward.1} parent=0 // pred_check_branch
    %26 = sbr.rel (0) target = $region29
  $region28: #{rugpull_detector_forward.1} parent=0 // pred_region
    _
  $region29: #{rugpull_detector_forward.1} parent=0 // pred_fallthru
    _
  %v27 = vld [vmem:[%s1] sm:$0xff]
  %v28 = vld [vmem:[%s1 + $0x8] sm:$0xff]
  %v29 = vld [vmem:[%s1 + $0x10] sm:$0xff]
  %v30 = vld [vmem:[%s1 + $0x18] sm:$0xff]
  %v31 = vld [vmem:[%s1 + $0x20] sm:$0xff]
  %v32 = vld [vmem:[%s1 + $0x28] sm:$0xff]
  %v33 = vld [vmem:[%s1 + $0x30] sm:$0xff]
  %v34 = vld [vmem:[%s1 + $0x38] sm:$0xff]
  %v35 = vld [vmem:[%s2] sm:$0xff]
  %v36 = vld [vmem:[%s2 + $0x8] sm:$0xff]
  %v37 = vld [vmem:[%s2 + $0x10] sm:$0xff]
  %v38 = vld [vmem:[%s2 + $0x18] sm:$0xff]
  %v39 = vld [vmem:[%s2 + $0x20] sm:$0xff]
  %v40 = vld [vmem:[%s2 + $0x28] sm:$0xff]
  %v41 = vld [vmem:[%s2 + $0x30] sm:$0xff]
  %v42 = vld [vmem:[%s2 + $0x38] sm:$0xff]
  %v43 = vld [vmem:[%s3] sm:$0xff]
  %v44 = vld [vmem:[%s3 + $0x8] sm:$0xff]
  %v45 = vld [vmem:[%s3 + $0x10] sm:$0xff]
  %v46 = vld [vmem:[%s3 + $0x18] sm:$0xff]
  %v47 = vld [vmem:[%s4] sm:$0xff]
  %v48 = vld [vmem:[%s4 + $0x8] sm:$0xff]
  %v49 = vld [vmem:[%s4 + $0x10] sm:$0xff]
  %v50 = vld [vmem:[%s4 + $0x18] sm:$0xff]
  %v51 = vld [vmem:[%s5] sm:$0xff]
  %v52 = vld [vmem:[%s5 + $0x8] sm:$0xff]
  %v53 = vld [vmem:[%s5 + $0x10] sm:$0xff]
  %v54 = vld [vmem:[%s5 + $0x18] sm:$0xff]
  %s55 = sld [smem:[#allocation2]]
  %v56 = vld [vmem:[%s0] sm:$0x77]
  %v57 = vunpack.c.l.bf16 %v56
  %v58 = vunpack.c.h.bf16 %v56
  %60 = vset.pattern.permute.xlu0 0
  %61 = vperm.xlu0 %60, %v35
  %v62 = vpop.permute.xlu0 %61
  %65 = vset.pattern.permute.xlu0 0
  %66 = vperm.xlu0 %65, %v36
  %v67 = vpop.permute.xlu0 %66
  %70 = vset.pattern.permute.xlu0 0
  %71 = vperm.xlu0 %70, %v37
  %v72 = vpop.permute.xlu0 %71
  %75 = vset.pattern.permute.xlu0 0
  %76 = vperm.xlu0 %75, %v38
  %v77 = vpop.permute.xlu0 %76
  %80 = vset.pattern.permute.xlu0 0
  %81 = vperm.xlu0 %80, %v39
  %v82 = vpop.permute.xlu0 %81
  %85 = vset.pattern.permute.xlu0 0
  %86 = vperm.xlu0 %85, %v40
  %v87 = vpop.permute.xlu0 %86
  %90 = vset.pattern.permute.xlu0 0
  %91 = vperm.xlu0 %90, %v41
  %v92 = vpop.permute.xlu0 %91
  %95 = vset.pattern.permute.xlu0 0
  %96 = vperm.xlu0 %95, %v42
  %v97 = vpop.permute.xlu0 %96
  %vm99 = vcmask 48128
  %v101 = vsel %vm99, %v27, 0
  %v104 = vsel %vm99, %v28, 0
  %v107 = vsel %vm99, %v29, 0
  %v110 = vsel %vm99, %v30, 0
  %v113 = vsel %vm99, %v31, 0
  %v116 = vsel %vm99, %v32, 0
  %v119 = vsel %vm99, %v33, 0
  %v122 = vsel %vm99, %v34, 0
  %vm124 = vcmask 1045504
  %v126 = vsel %vm124, %v57, 0
  %v129 = vsel %vm124, %v58, 0
  %131 = vmatprep.subr.mxu0 %v129
  %132 = vmatpush1.msra.mxu0 %v126
  %133 = vmatprep.subr.mxu0 0.0
  %134 = vmatpush1.msra.mxu0 0.0
  %135 = vmatprep.subr.mxu0 0.0
  %136 = vmatpush1.msra.mxu0 0.0
  %137 = vmatprep.subr.mxu0 0.0
  %138 = vmatpush1.msra.mxu0 0.0
  %139 = vmatprep.subr.mxu0 0.0
  %140 = vmatpush1.msra.mxu0 0.0
  %141 = vmatprep.subr.mxu0 0.0
  %142 = vmatpush1.msra.mxu0 0.0
  %143 = vmatprep.subr.mxu0 0.0
  %144 = vmatpush1.msra.mxu0 0.0
  %145 = vmatprep.subr.mxu0 0.0
  %146 = vmatpush1.msra.mxu0 0.0
  %147 = vmatprep.subr.mxu0 0.0
  %148 = vmatpush1.msra.mxu0 0.0
  %149 = vmatprep.subr.mxu0 0.0
  %150 = vmatpush1.msra.mxu0 0.0
  %151 = vmatprep.subr.mxu0 0.0
  %152 = vmatpush1.msra.mxu0 0.0
  %153 = vmatprep.subr.mxu0 0.0
  %154 = vmatpush1.msra.mxu0 0.0
  %155 = vmatprep.subr.mxu0 0.0
  %156 = vmatpush1.msra.mxu0 0.0
  %157 = vmatprep.subr.mxu0 0.0
  %158 = vmatpush1.msra.mxu0 0.0
  %159 = vmatprep.subr.mxu0 0.0
  %160 = vmatpush1.msra.mxu0 0.0
  %161 = vmatprep.subr.mxu0 0.0
  %162 = vmatpush1.msra.mxu0 0.0
  %163 = vmatprep.subr.mxu0 0.0
  %164 = vmatpush1.msra.mxu0 0.0
  %165 = vmatprep.subr.mxu0 0.0
  %166 = vmatpush1.msra.mxu0 0.0
  %167 = vmatprep.subr.mxu0 0.0
  %168 = vmatpush1.msra.mxu0 0.0
  %169 = vmatprep.subr.mxu0 0.0
  %170 = vmatpush1.msra.mxu0 0.0
  %171 = vmatprep.subr.mxu0 0.0
  %172 = vmatpush1.msra.mxu0 0.0
  %173 = vmatprep.subr.mxu0 0.0
  %174 = vmatpush1.msra.mxu0 0.0
  %175 = vmatprep.subr.mxu0 0.0
  %176 = vmatpush1.msra.mxu0 0.0
  %177 = vmatprep.subr.mxu0 0.0
  %178 = vmatpush1.msra.mxu0 0.0
  %179 = vmatprep.subr.mxu0 0.0
  %180 = vmatpush1.msra.mxu0 0.0
  %181 = vmatprep.subr.mxu0 0.0
  %182 = vmatpush1.msra.mxu0 0.0
  %183 = vmatprep.subr.mxu0 0.0
  %184 = vmatpush1.msra.mxu0 0.0
  %185 = vmatprep.subr.mxu0 0.0
  %186 = vmatpush1.msra.mxu0 0.0
  %187 = vmatprep.subr.mxu0 0.0
  %188 = vmatpush1.msra.mxu0 0.0
  %189 = vmatprep.subr.mxu0 0.0
  %190 = vmatpush1.msra.mxu0 0.0
  %191 = vmatprep.subr.mxu0 0.0
  %192 = vmatpush1.msra.mxu0 0.0
  %193 = vmatprep.subr.mxu0 0.0
  %194 = vmatpush1.msra.mxu0 0.0
  %195 = vmatprep.mubr.f32.mxu0 0.0
  %196 = vmatmul.mubr.f32.gmra.mrb[0].mxu0 %v101
  %v197 = vpop.f32.mrb[0].mxu0
  %v198 = vadd.f32 %v62, %v197
  %v199 = vpop.f32.mrb[0].mxu0
  %v200 = vadd.f32 %v62, %v199
  %201 = vmatprep.mubr.f32.mxu0 0.0
  %202 = vmatmul.mubr.f32.gmra.mrb[0].mxu0 %v104
  %v203 = vpop.f32.mrb[0].mxu0
  %v204 = vadd.f32 %v67, %v203
  %v205 = vpop.f32.mrb[0].mxu0
  %v206 = vadd.f32 %v67, %v205
  %207 = vmatprep.mubr.f32.mxu0 0.0
  %208 = vmatmul.mubr.f32.gmra.mrb[0].mxu0 %v107
  %v209 = vpop.f32.mrb[0].mxu0
  %v210 = vadd.f32 %v72, %v209
  %v211 = vpop.f32.mrb[0].mxu0
  %v212 = vadd.f32 %v72, %v211
  %213 = vmatprep.mubr.f32.mxu0 0.0
  %214 = vmatmul.mubr.f32.gmra.mrb[0].mxu0 %v110
  %v215 = vpop.f32.mrb[0].mxu0
  %v216 = vadd.f32 %v77, %v215
  %v217 = vpop.f32.mrb[0].mxu0
  %v218 = vadd.f32 %v77, %v217
  %219 = vmatprep.mubr.f32.mxu0 0.0
  %220 = vmatmul.mubr.f32.gmra.mrb[0].mxu0 %v113
  %v221 = vpop.f32.mrb[0].mxu0
  %v222 = vadd.f32 %v82, %v221
  %v223 = vpop.f32.mrb[0].mxu0
  %v224 = vadd.f32 %v82, %v223
  %225 = vmatprep.mubr.f32.mxu0 0.0
  %226 = vmatmul.mubr.f32.gmra.mrb[0].mxu0 %v116
  %v227 = vpop.f32.mrb[0].mxu0
  %v228 = vadd.f32 %v87, %v227
  %v229 = vpop.f32.mrb[0].mxu0
  %v230 = vadd.f32 %v87, %v229
  %231 = vmatprep.mubr.f32.mxu0 0.0
  %232 = vmatmul.mubr.f32.gmra.mrb[0].mxu0 %v119
  %v233 = vpop.f32.mrb[0].mxu0
  %v234 = vadd.f32 %v92, %v233
  %v235 = vpop.f32.mrb[0].mxu0
  %v236 = vadd.f32 %v92, %v235
  %237 = vmatprep.mubr.f32.mxu0 0.0
  %238 = vmatmul.mubr.f32.gmra.mrb[0].mxu0 %v122
  %v239 = vpop.f32.mrb[0].mxu0
  %v240 = vadd.f32 %v97, %v239
  %v241 = vpop.f32.mrb[0].mxu0
  %v242 = vadd.f32 %v97, %v241
  %243 = vdwg.mxu0
  %v244 = vmax.f32 %v198, 0.0
  %v245 = vmax.f32 %v200, 0.0
  %v246 = vmax.f32 %v204, 0.0
  %v247 = vmax.f32 %v206, 0.0
  %v248 = vmax.f32 %v210, 0.0
  %v249 = vmax.f32 %v212, 0.0
  %v250 = vmax.f32 %v216, 0.0
  %v251 = vmax.f32 %v218, 0.0
  %v252 = vmax.f32 %v222, 0.0
  %v253 = vmax.f32 %v224, 0.0
  %v254 = vmax.f32 %v228, 0.0
  %v255 = vmax.f32 %v230, 0.0
  %v256 = vmax.f32 %v234, 0.0
  %v257 = vmax.f32 %v236, 0.0
  %v258 = vmax.f32 %v240, 0.0
  %v259 = vmax.f32 %v242, 0.0
  %261 = vset.pattern.permute.xlu0 0
  %262 = vperm.xlu0 %261, %v47
  %v263 = vpop.permute.xlu0 %262
  %266 = vset.pattern.permute.xlu0 0
  %267 = vperm.xlu0 %266, %v48
  %v268 = vpop.permute.xlu0 %267
  %271 = vset.pattern.permute.xlu0 0
  %272 = vperm.xlu0 %271, %v49
  %v273 = vpop.permute.xlu0 %272
  %276 = vset.pattern.permute.xlu0 0
  %277 = vperm.xlu0 %276, %v50
  %v278 = vpop.permute.xlu0 %277
  %vm280 = vcmask 523264
  %v282 = vsel %vm280, %v43, 0
  %v285 = vsel %vm280, %v44, 0
  %v288 = vsel %vm280, %v45, 0
  %v291 = vsel %vm280, %v46, 0
  %293 = vmatprep.subr.mxu0 %v245
  %294 = vmatpush1.msra.mxu0 %v244
  %295 = vmatprep.subr.mxu0 %v247
  %296 = vmatpush1.msra.mxu0 %v246
  %297 = vmatprep.subr.mxu0 %v249
  %298 = vmatpush1.msra.mxu0 %v248
  %299 = vmatprep.subr.mxu0 %v251
  %300 = vmatpush1.msra.mxu0 %v250
  %301 = vmatprep.subr.mxu0 %v253
  %302 = vmatpush1.msra.mxu0 %v252
  %303 = vmatprep.subr.mxu0 %v255
  %304 = vmatpush1.msra.mxu0 %v254
  %305 = vmatprep.subr.mxu0 %v257
  %306 = vmatpush1.msra.mxu0 %v256
  %307 = vmatprep.subr.mxu0 %v259
  %308 = vmatpush1.msra.mxu0 %v258
  %309 = vmatprep.subr.mxu0 0.0
  %310 = vmatpush1.msra.mxu0 0.0
  %311 = vmatprep.subr.mxu0 0.0
  %312 = vmatpush1.msra.mxu0 0.0
  %313 = vmatprep.subr.mxu0 0.0
  %314 = vmatpush1.msra.mxu0 0.0
  %315 = vmatprep.subr.mxu0 0.0
  %316 = vmatpush1.msra.mxu0 0.0
  %317 = vmatprep.subr.mxu0 0.0
  %318 = vmatpush1.msra.mxu0 0.0
  %319 = vmatprep.subr.mxu0 0.0
  %320 = vmatpush1.msra.mxu0 0.0
  %321 = vmatprep.subr.mxu0 0.0
  %322 = vmatpush1.msra.mxu0 0.0
  %323 = vmatprep.subr.mxu0 0.0
  %324 = vmatpush1.msra.mxu0 0.0
  %325 = vmatprep.subr.mxu0 0.0
  %326 = vmatpush1.msra.mxu0 0.0
  %327 = vmatprep.subr.mxu0 0.0
  %328 = vmatpush1.msra.mxu0 0.0
  %329 = vmatprep.subr.mxu0 0.0
  %330 = vmatpush1.msra.mxu0 0.0
  %331 = vmatprep.subr.mxu0 0.0
  %332 = vmatpush1.msra.mxu0 0.0
  %333 = vmatprep.subr.mxu0 0.0
  %334 = vmatpush1.msra.mxu0 0.0
  %335 = vmatprep.subr.mxu0 0.0
  %336 = vmatpush1.msra.mxu0 0.0
  %337 = vmatprep.subr.mxu0 0.0
  %338 = vmatpush1.msra.mxu0 0.0
  %339 = vmatprep.subr.mxu0 0.0
  %340 = vmatpush1.msra.mxu0 0.0
  %341 = vmatprep.subr.mxu0 0.0
  %342 = vmatpush1.msra.mxu0 0.0
  %343 = vmatprep.subr.mxu0 0.0
  %344 = vmatpush1.msra.mxu0 0.0
  %345 = vmatprep.subr.mxu0 0.0
  %346 = vmatpush1.msra.mxu0 0.0
  %347 = vmatprep.subr.mxu0 0.0
  %348 = vmatpush1.msra.mxu0 0.0
  %349 = vmatprep.subr.mxu0 0.0
  %350 = vmatpush1.msra.mxu0 0.0
  %351 = vmatprep.subr.mxu0 0.0
  %352 = vmatpush1.msra.mxu0 0.0
  %353 = vmatprep.subr.mxu0 0.0
  %354 = vmatpush1.msra.mxu0 0.0
  %355 = vmatprep.subr.mxu0 0.0
  %356 = vmatpush1.msra.mxu0 0.0
  %357 = vmatprep.mubr.f32.mxu0 0.0
  %358 = vmatmul.mubr.f32.gmra.mrb[0].mxu0 %v282
  %v359 = vpop.f32.mrb[0].mxu0
  %v360 = vadd.f32 %v263, %v359
  %v361 = vpop.f32.mrb[0].mxu0
  %v362 = vadd.f32 %v263, %v361
  %363 = vmatprep.mubr.f32.mxu0 0.0
  %364 = vmatmul.mubr.f32.gmra.mrb[0].mxu0 %v285
  %v365 = vpop.f32.mrb[0].mxu0
  %v366 = vadd.f32 %v268, %v365
  %v367 = vpop.f32.mrb[0].mxu0
  %v368 = vadd.f32 %v268, %v367
  %369 = vmatprep.mubr.f32.mxu0 0.0
  %370 = vmatmul.mubr.f32.gmra.mrb[0].mxu0 %v288
  %v371 = vpop.f32.mrb[0].mxu0
  %v372 = vadd.f32 %v273, %v371
  %v373 = vpop.f32.mrb[0].mxu0
  %v374 = vadd.f32 %v273, %v373
  %375 = vmatprep.mubr.f32.mxu0 0.0
  %376 = vmatmul.mubr.f32.gmra.mrb[0].mxu0 %v291
  %v377 = vpop.f32.mrb[0].mxu0
  %v378 = vadd.f32 %v278, %v377
  %v379 = vpop.f32.mrb[0].mxu0
  %v380 = vadd.f32 %v278, %v379
  %381 = vdwg.mxu0
  %v382 = vmax.f32 %v360, 0.0
  %v383 = vmax.f32 %v362, 0.0
  %v384 = vmax.f32 %v366, 0.0
  %v385 = vmax.f32 %v368, 0.0
  %v386 = vmax.f32 %v372, 0.0
  %v387 = vmax.f32 %v374, 0.0
  %v388 = vmax.f32 %v378, 0.0
  %v389 = vmax.f32 %v380, 0.0
  %391 = vset.pattern.permute.xlu0 0
  %392 = vperm.xlu0 %391, %v51
  %v393 = vpop.permute.xlu0 %392
  %396 = vset.pattern.permute.xlu0 0
  %397 = vperm.xlu0 %396, %v52
  %v398 = vpop.permute.xlu0 %397
  %401 = vset.pattern.permute.xlu0 0
  %402 = vperm.xlu0 %401, %v53
  %v403 = vpop.permute.xlu0 %402
  %406 = vset.pattern.permute.xlu0 0
  %407 = vperm.xlu0 %406, %v54
  %v408 = vpop.permute.xlu0 %407
  %v410 = vmul.f32 %v382, %v393
  %v411 = vmul.f32 %v383, %v393
  %v412 = vmul.f32 %v384, %v398
  %v413 = vmul.f32 %v385, %v398
  %v414 = vmul.f32 %v386, %v403
  %v415 = vmul.f32 %v387, %v403
  %v416 = vmul.f32 %v388, %v408
  %v417 = vmul.f32 %v389, %v408
  %v418 = vadd.f32 %v410, %v412
  %v419 = vadd.f32 %v418, %v414
  %v420 = vadd.f32 %v419, %v416
  %v421 = vrot.slane %v420, 4
  %v422 = vadd.f32 %v420, %v421
  %v423 = vrot.slane %v422, 2
  %v424 = vadd.f32 %v422, %v423
  %v425 = vrot.slane %v424, 1
  %v426 = vadd.f32 %v424, %v425
  %v427 = vadd.f32 %v411, %v413
  %v428 = vadd.f32 %v427, %v415
  %v429 = vadd.f32 %v428, %v417
  %v430 = vrot.slane %v429, 4
  %v431 = vadd.f32 %v429, %v430
  %v432 = vrot.slane %v431, 2
  %v433 = vadd.f32 %v431, %v432
  %v434 = vrot.slane %v433, 1
  %v435 = vadd.f32 %v433, %v434
  %v436 = vstv %s55
  %v437 = vadd.f32 %v426, %v436
  %v438 = vadd.f32 %v435, %v436
  %v439 = vsub.f32 0.0, %v437
  %v440 = vsub.f32 0.0, %v438
  %v441 = vmul.f32 %v439, 1.442695
  %v442 = vpow.pop %v441
  %v443 = vmul.f32 %v440, 1.442695
  %v444 = vpow.pop %v443
  %v445 = vadd.f32 %v442, 1.0
  %v446 = vadd.f32 %v444, 1.0
  %v447 = vrcp.pop %v445
  %v448 = vmul.f32 1.0, %v447
  %v449 = vrcp.pop %v446
  %v450 = vmul.f32 1.0, %v449
  %v453 = vcombine.low %v448, %v450
  %v455 = vunpack.c.l.s4 1966171168
  %v456 = vunpack.c.0.s8 %v455
  %v457 = vlaneseq
  %v458 = vshrl.u32 %v457, 7
  %v459 = vsub.s32 %v456, %v458
  %v460 = vrot.slane %v453, %v459
  %v462 = vunpack.c.l.s4 1966171168
  %v463 = vunpack.c.0.s8 %v462
  %v464 = vlaneseq
  %v465 = vshrl.u32 %v464, 7
  %v466 = vsub.s32 %v463, %v465
  %v467 = vrot.slane %v460, %v466
  %v469 = vlaneseq
  %vm470 = vcmp.ge.s32.totalorder %v469, 0
  %vm471 = vcmp.lt.s32.totalorder %v469, 256
  %vm472 = vmand %vm470, %vm471
  %473 = vst.msk [vmem:[%s7] sm:$0x3] %vm472, %v467
  // Predicated region
  $region30: #{rugpull_detector_forward.1} parent=0 // pred_check
    _
  $region31: #{rugpull_detector_forward.1} parent=0 // pred_check_branch
    %475 = sbr.rel (0) target = $region33
  $region32: #{rugpull_detector_forward.1} parent=0 // pred_region
    _
  $region33: #{rugpull_detector_forward.1} parent=0 // pred_fallthru
    _
  // Predicated region
  $region34: #{rugpull_detector_forward.1} parent=0 // pred_check
    _
  $region35: #{rugpull_detector_forward.1} parent=0 // pred_check_branch
    %477 = sbr.rel (0) target = $region37
  $region36: #{rugpull_detector_forward.1} parent=0 // pred_region
    _
  $region37: #{rugpull_detector_forward.1} parent=0 // pred_fallthru
    _

</llo_original>
